<compile_context>
chip_gen: v6e
topology: v6e:2x2x1
jax: 0.10.0
libtpu: 0.0.40
codegen_flags: <defaults>
</compile_context>

<pallas_src>
import jax
import jax.numpy as jnp
import numpy as np
from jax import lax
from jax.experimental import pallas as pl
from jax.experimental.pallas import tpu as pltpu

NEG_INF = -1e30


def _make_kernel(tq, return_attention, matmul_dtype):
    def kernel(x_ref, wk_ref, wp_ref, wci_ref, wcc_ref, bc_ref, out_ref, *attn_refs):
        tb, T, H = x_ref.shape
        q0 = pl.program_id(1) * tq                        # global query offset of this tile

        x_f32 = x_ref[...].astype(jnp.float32)            # (tb, T, H) keys / values
        x_mm = x_f32.astype(matmul_dtype)

        # ---- key_vectors = tanh(x @ W_k): shared weight, batch folded into matmul M ----
        keys = jnp.tanh(
            jnp.dot(x_mm.reshape(tb * T, H),
                    wk_ref[...].astype(matmul_dtype),
                    preferred_element_type=jnp.float32)
        ).reshape(tb, T, H)                               # (tb, T, H) f32

        # ---- attention logits (query independent): keys . weight_proj ----
        logits = jnp.sum(keys * wp_ref[...][None, :, :], axis=-1)        # (tb, T)

        # ---- masked softmax over keys j < i (rows i < 2 are dummies, overwritten below) ----
        qi = q0 + lax.broadcasted_iota(jnp.int32, (tq, T), 0)            # query index
        kj = lax.broadcasted_iota(jnp.int32, (tq, T), 1)                 # key index
        mask = kj < jnp.maximum(qi, 1)                                   # (tq, T)
        ml = jnp.where(mask[None, :, :], logits[:, None, :], NEG_INF)    # (tb, tq, T)
        m = jnp.max(ml, axis=-1, keepdims=True)
        e = jnp.exp(ml - m)
        l = jnp.sum(e, axis=-1, keepdims=True)
        w = e * pl.reciprocal(l, approx=True)                            # (tb, tq, T)
        # TODO(synk): for large T, switch to flash-style key tiling (online m/l/acc) so the
        #             key axis becomes a trailing "arbitrary" grid dim instead of resident T.

        # ---- context_i = sum_j w[i,j] * x[j]  (per-batch weights -> stays batched) ----
        ctx = jnp.einsum('bqk,bkh->bqh', w.astype(matmul_dtype), x_mm,
                         preferred_element_type=jnp.float32)             # (tb, tq, H)

        # ---- output_i = tanh([x_i, ctx_i] @ W_c^T + b_c): split + batch-folded matmuls ----
        if tq == T:
            xq = x_f32                                                   # (tb, tq, H)
        else:
            xq = x_ref[:, pl.ds(pl.multiple_of(q0, 8), tq), :].astype(jnp.float32)
        acc = (jnp.dot(xq.astype(matmul_dtype).reshape(tb * tq, H),
                       wci_ref[...].astype(matmul_dtype),
                       preferred_element_type=jnp.float32)
               + jnp.dot(ctx.astype(matmul_dtype).reshape(tb * tq, H),
                         wcc_ref[...].astype(matmul_dtype),
                         preferred_element_type=jnp.float32)
               + bc_ref[...])                                            # (tb*tq, H)
        y = jnp.tanh(acc).reshape(tb, tq, H)

        # first two timesteps pass through unchanged
        warm = (q0 + lax.broadcasted_iota(jnp.int32, (1, tq, 1), 1)) < 2
        out_ref[...] = jnp.where(warm, xq, y).astype(out_ref.dtype)

        if return_attention:
            attn_refs[0][...] = w.astype(attn_refs[0].dtype)

    return kernel


def _pick_batch_tile(B, T, H):
    """Batch tile: cap per-step VMEM ~8 MiB, keep folded matmul M=tb*T reasonable, and keep
    >=2 grid steps so v7x's two TensorCores both get work."""
    per_b = 4 * (4 * T * H + 4 * T * T) * 2       # rough f32 footprint per batch row, 2x buffered
    tb = max(1, min(B, (8 << 20) // max(per_b, 1)))
    tb = min(tb, max(1, 512 // max(T, 1)))        # folded M up to ~512 rows
    if B >= 2:
        tb = min(tb, max(1, B // 2))              # at least 2 grid steps along batch
    while B % tb:
        tb -= 1
    return tb


def mlp_absolute_attention(x_tbh, W_k, w_proj, W_c, b_c, *,
                           batch_tile=None, matmul_dtype=jnp.float32,
                           return_attention=True):
    """x_tbh: (T, B, H) like the PyTorch module.
    Returns (results (T, B, H), attn (B, T, T) or None)."""
    T, B, H = x_tbh.shape
    # TODO(synk): accept/return batch-first (B,T,H) upstream to drop these transpose passes.
    x = jnp.transpose(x_tbh, (1, 0, 2)).astype(jnp.float32)              # (B, T, H)

    # Shared weights stay 2-D (no per-batch replication).
    wk = W_k.astype(jnp.float32)                                         # (H, H)
    wci = W_c[:, :H].T.astype(jnp.float32)                               # (H, H) acts on inputs[i]
    wcc = W_c[:, H:].T.astype(jnp.float32)                               # (H, H) acts on context
    wp = w_proj.reshape(1, H).astype(jnp.float32)
    bc = b_c.reshape(1, H).astype(jnp.float32)

    tq = 128 if (T > 128 and T % 128 == 0) else T
    tb = batch_tile if batch_tile is not None else _pick_batch_tile(B, T, H)
    grid = (B // tb, T // tq)

    kernel = _make_kernel(tq, return_attention, matmul_dtype)

    out_shapes = [jax.ShapeDtypeStruct((B, T, H), jnp.float32)]
    out_specs = [pl.BlockSpec((tb, tq, H), lambda bi, qi: (bi, qi, 0))]
    if return_attention:
        out_shapes.append(jax.ShapeDtypeStruct((B, T, T), jnp.float32))
        out_specs.append(pl.BlockSpec((tb, tq, T), lambda bi, qi: (bi, qi, 0)))

    res = pl.pallas_call(
        kernel,
        out_shape=tuple(out_shapes),
        grid_spec=pltpu.PrefetchScalarGridSpec(
            num_scalar_prefetch=0,
            grid=grid,
            in_specs=[
                pl.BlockSpec((tb, T, H), lambda bi, qi: (bi, 0, 0)),     # x (keys + values)
                pl.BlockSpec((H, H), lambda bi, qi: (0, 0)),             # W_k
                pl.BlockSpec((1, H), lambda bi, qi: (0, 0)),             # weight_proj
                pl.BlockSpec((H, H), lambda bi, qi: (0, 0)),             # W_c[:, :H]^T
                pl.BlockSpec((H, H), lambda bi, qi: (0, 0)),             # W_c[:, H:]^T
                pl.BlockSpec((1, H), lambda bi, qi: (0, 0)),             # concat bias
            ],
            out_specs=out_specs),
        compiler_params=pltpu.CompilerParams(
            dimension_semantics=("parallel", "parallel"),
            vmem_limit_bytes=32 * 1024 * 1024),
    )(x, wk, wp, wci, wcc, bc)

    if return_attention:
        out, attn = res
    else:
        (out,) = res
        attn = None
    return jnp.transpose(out, (1, 0, 2)), attn                           # (T, B, H), (B, T, T)


def ref_forward(x, W_k, w_proj, W_c, b_c):
    """Plain-JAX port of the PyTorch loop (for correctness checking)."""
    T, B, H = x.shape
    outs = []
    for i in range(T):
        if i < 2:
            outs.append(x[i][None])
        else:
            hidden = jnp.transpose(x[:i], (1, 0, 2))            # (B, i, H)
            cur = x[i][:, None, :]                              # (B, 1, H)
            keys = jnp.tanh(hidden @ W_k)                       # (B, i, H)
            aw = jax.nn.softmax(keys @ w_proj, axis=1)          # (B, i, 1)
            ctx = jnp.sum(hidden * aw, axis=1, keepdims=True)   # (B, 1, H)
            cat = jnp.concatenate([cur, ctx], axis=-1)          # (B, 1, 2H)
            y = jnp.tanh(cat @ W_c.T + b_c)                     # (B, 1, H)
            outs.append(jnp.transpose(y, (1, 0, 2)))
    return jnp.concatenate(outs, axis=0)


if __name__ == "__main__":
    T, B, H = 8, 2, 32
    key = jax.random.PRNGKey(0)
    k1, k2, k3, k4 = jax.random.split(key, 4)
    gain = float(np.sqrt(2.0))  # nn.init.calculate_gain('relu')

    def xavier_uniform(k, shape, gain):
        fan_out, fan_in = shape
        bound = gain * np.sqrt(6.0 / (fan_in + fan_out))
        return jax.random.uniform(k, shape, jnp.float32, -bound, bound)

    W_k = xavier_uniform(k1, (H, H), gain)          # nn.Parameter(nhid, nhid)
    w_proj = xavier_uniform(k2, (H, 1), gain)       # nn.Parameter(nhid, 1)
    W_c = xavier_uniform(k3, (H, 2 * H), gain)      # concat.weight (nhid, 2*nhid)
    b_c = jnp.zeros((H,), jnp.float32)              # concat.bias zeros
    x = jax.random.normal(k4, (T, B, H), jnp.float32)

    ref = np.asarray(ref_forward(x, W_k, w_proj, W_c, b_c))

    # f32 MXU path (exact math except approx-reciprocal softmax normalization).
    results, attn = mlp_absolute_attention(x, W_k, w_proj, W_c, b_c)
    results = jax.block_until_ready(results)
    attn = jax.block_until_ready(attn)
    np.testing.assert_allclose(np.asarray(results), ref, rtol=5e-3, atol=5e-3)

    # bf16-into-MXU fast path for v6e/v7x (f32 accumulate), attention output skipped.
    results_bf16, _ = mlp_absolute_attention(
        x, W_k, w_proj, W_c, b_c, matmul_dtype=jnp.bfloat16, return_attention=False)
    results_bf16 = jax.block_until_ready(results_bf16)
    np.testing.assert_allclose(np.asarray(results_bf16), ref, rtol=5e-2, atol=5e-2)

    print("KERNEL_OK")
</pallas_src>

<mosaic_0001>
module attributes {stable_mosaic.version = 11 : i64} {
  func.func @kernel(%arg0: i32, %arg1: i32, %arg2: memref<1x8x32xf32, #tpu.memory_space<vmem>>, %arg3: memref<32x32xf32, #tpu.memory_space<vmem>>, %arg4: memref<1x32xf32, #tpu.memory_space<vmem>>, %arg5: memref<32x32xf32, #tpu.memory_space<vmem>>, %arg6: memref<32x32xf32, #tpu.memory_space<vmem>>, %arg7: memref<1x32xf32, #tpu.memory_space<vmem>>, %arg8: memref<1x8x32xf32, #tpu.memory_space<vmem>>, %arg9: memref<1x8x8xf32, #tpu.memory_space<vmem>>) attributes {dimension_semantics = [#tpu.dimension_semantics<parallel>, #tpu.dimension_semantics<parallel>], iteration_bounds = array<i64: 2, 1>, scalar_prefetch = 0 : i64, scratch_operands = 0 : i64, tpu.core_type = #tpu.core_type<tc>, window_params = [{transform_indices = @transform_0, window_bounds = array<i64: 1, 8, 32>}, {pipeline_mode = #tpu.pipeline_mode<synchronous>, transform_indices = @transform_1, window_bounds = array<i64: 32, 32>}, {pipeline_mode = #tpu.pipeline_mode<synchronous>, transform_indices = @transform_2, window_bounds = array<i64: 1, 32>}, {pipeline_mode = #tpu.pipeline_mode<synchronous>, transform_indices = @transform_3, window_bounds = array<i64: 32, 32>}, {pipeline_mode = #tpu.pipeline_mode<synchronous>, transform_indices = @transform_4, window_bounds = array<i64: 32, 32>}, {pipeline_mode = #tpu.pipeline_mode<synchronous>, transform_indices = @transform_5, window_bounds = array<i64: 1, 32>}, {transform_indices = @transform_6, window_bounds = array<i64: 1, 8, 32>}, {transform_indices = @transform_7, window_bounds = array<i64: 1, 8, 8>}]} {
    %c8_i32 = arith.constant 8 : i32
    %0 = arith.muli %arg1, %c8_i32 : i32
    %c0 = arith.constant 0 : index
    %c0_0 = arith.constant 0 : index
    %c0_1 = arith.constant 0 : index
    %1 = vector.load %arg2[%c0, %c0_0, %c0_1] : memref<1x8x32xf32, #tpu.memory_space<vmem>>, vector<1x8x32xf32>
    %2 = vector.shape_cast %1 : vector<1x8x32xf32> to vector<8x32xf32>
    %c0_2 = arith.constant 0 : index
    %c0_3 = arith.constant 0 : index
    %3 = vector.load %arg3[%c0_2, %c0_3] : memref<32x32xf32, #tpu.memory_space<vmem>>, vector<32x32xf32>
    %cst = arith.constant dense<0.000000e+00> : vector<8x32xf32>
    %4 = tpu.matmul %2, %3, %cst {dimension_numbers = #tpu.dot_dimension_numbers<[1], [0], [0], [1], [0, 0, 1, 1], [], []>} : vector<8x32xf32>, vector<32x32xf32>, vector<8x32xf32> -> vector<8x32xf32>
    %5 = math.tanh %4 : vector<8x32xf32>
    %6 = vector.shape_cast %5 : vector<8x32xf32> to vector<1x8x32xf32>
    %c0_4 = arith.constant 0 : index
    %c0_5 = arith.constant 0 : index
    %7 = vector.load %arg4[%c0_4, %c0_5] : memref<1x32xf32, #tpu.memory_space<vmem>>, vector<1x32xf32>
    %8 = vector.shape_cast %7 : vector<1x32xf32> to vector<1x1x32xf32>
    %9 = vector.broadcast %8 : vector<1x1x32xf32> to vector<1x8x32xf32>
    %10 = arith.mulf %6, %9 : vector<1x8x32xf32>
    %cst_6 = arith.constant dense<0.000000e+00> : vector<1x8xf32>
    %11 = vector.multi_reduction <add>, %10, %cst_6 [2] : vector<1x8x32xf32> to vector<1x8xf32>
    %12 = tpu.iota {dimensions = array<i32: 0>} : vector<8x8xi32>
    %13 = vector.broadcast %0 : i32 to vector<8x8xi32>
    %14 = arith.addi %13, %12 : vector<8x8xi32>
    %15 = tpu.iota {dimensions = array<i32: 1>} : vector<8x8xi32>
    %c1_i32 = arith.constant 1 : i32
    %16 = vector.broadcast %c1_i32 : i32 to vector<8x8xi32>
    %17 = arith.maxsi %14, %16 : vector<8x8xi32>
    %18 = arith.cmpi slt, %15, %17 : vector<8x8xi32>
    %19 = vector.shape_cast %18 : vector<8x8xi1> to vector<1x8x8xi1>
    %20 = vector.shape_cast %11 : vector<1x8xf32> to vector<1x1x8xf32>
    %cst_7 = arith.constant -1.000000e+30 : f32
    %21 = vector.shape_cast %20 : vector<1x1x8xf32> to vector<1x1x8xf32>
    %22 = vector.broadcast %21 : vector<1x1x8xf32> to vector<1x8x8xf32>
    %23 = vector.broadcast %cst_7 : f32 to vector<1x8x8xf32>
    %24 = arith.select %19, %22, %23 : vector<1x8x8xi1>, vector<1x8x8xf32>
    %cst_8 = arith.constant dense<0xFF800000> : vector<1x8xf32>
    %25 = vector.multi_reduction <maximumf>, %24, %cst_8 [2] : vector<1x8x8xf32> to vector<1x8xf32>
    %26 = vector.shape_cast %25 : vector<1x8xf32> to vector<1x8x1xf32>
    %27 = vector.broadcast %26 : vector<1x8x1xf32> to vector<1x8x8xf32>
    %28 = arith.subf %24, %27 : vector<1x8x8xf32>
    %29 = math.exp %28 : vector<1x8x8xf32>
    %cst_9 = arith.constant dense<0.000000e+00> : vector<1x8xf32>
    %30 = vector.multi_reduction <add>, %29, %cst_9 [2] : vector<1x8x8xf32> to vector<1x8xf32>
    %31 = vector.shape_cast %30 : vector<1x8xf32> to vector<1x8x1xf32>
    %32 = tpu.reciprocal %31 {approx = true} : vector<1x8x1xf32> -> vector<1x8x1xf32>
    %33 = vector.broadcast %32 : vector<1x8x1xf32> to vector<1x8x8xf32>
    %34 = arith.mulf %29, %33 : vector<1x8x8xf32>
    "tpu.trace_start"() <{level = 10 : i32, message = "bqk,bkh->bqh"}> : () -> ()
    %cst_10 = arith.constant dense<0.000000e+00> : vector<1x8x32xf32>
    %35 = tpu.matmul %34, %1, %cst_10 {dimension_numbers = #tpu.dot_dimension_numbers<[2], [1], [1], [2], [0, 0, 0, 1, 1, 2], [0], [0]>} : vector<1x8x8xf32>, vector<1x8x32xf32>, vector<1x8x32xf32> -> vector<1x8x32xf32>
    "tpu.trace_stop"() : () -> ()
    %36 = vector.shape_cast %1 : vector<1x8x32xf32> to vector<8x32xf32>
    %c0_11 = arith.constant 0 : index
    %c0_12 = arith.constant 0 : index
    %37 = vector.load %arg5[%c0_11, %c0_12] : memref<32x32xf32, #tpu.memory_space<vmem>>, vector<32x32xf32>
    %cst_13 = arith.constant dense<0.000000e+00> : vector<8x32xf32>
    %38 = tpu.matmul %36, %37, %cst_13 {dimension_numbers = #tpu.dot_dimension_numbers<[1], [0], [0], [1], [0, 0, 1, 1], [], []>} : vector<8x32xf32>, vector<32x32xf32>, vector<8x32xf32> -> vector<8x32xf32>
    %39 = vector.shape_cast %35 : vector<1x8x32xf32> to vector<8x32xf32>
    %c0_14 = arith.constant 0 : index
    %c0_15 = arith.constant 0 : index
    %40 = vector.load %arg6[%c0_14, %c0_15] : memref<32x32xf32, #tpu.memory_space<vmem>>, vector<32x32xf32>
    %cst_16 = arith.constant dense<0.000000e+00> : vector<8x32xf32>
    %41 = tpu.matmul %39, %40, %cst_16 {dimension_numbers = #tpu.dot_dimension_numbers<[1], [0], [0], [1], [0, 0, 1, 1], [], []>} : vector<8x32xf32>, vector<32x32xf32>, vector<8x32xf32> -> vector<8x32xf32>
    %42 = arith.addf %38, %41 : vector<8x32xf32>
    %c0_17 = arith.constant 0 : index
    %c0_18 = arith.constant 0 : index
    %43 = vector.load %arg7[%c0_17, %c0_18] : memref<1x32xf32, #tpu.memory_space<vmem>>, vector<1x32xf32>
    %44 = vector.broadcast %43 : vector<1x32xf32> to vector<8x32xf32>
    %45 = arith.addf %42, %44 : vector<8x32xf32>
    %46 = math.tanh %45 : vector<8x32xf32>
    %47 = vector.shape_cast %46 : vector<8x32xf32> to vector<1x8x32xf32>
    %48 = tpu.iota {dimensions = array<i32: 1>} : vector<1x8x1xi32>
    %49 = vector.broadcast %0 : i32 to vector<1x8x1xi32>
    %50 = arith.addi %49, %48 : vector<1x8x1xi32>
    %c2_i32 = arith.constant 2 : i32
    %51 = vector.broadcast %c2_i32 : i32 to vector<1x8x1xi32>
    %52 = arith.cmpi slt, %50, %51 : vector<1x8x1xi32>
    %53 = vector.shape_cast %52 : vector<1x8x1xi1> to vector<1x8x1xi1>
    %54 = vector.broadcast %53 : vector<1x8x1xi1> to vector<1x8x32xi1>
    %55 = arith.select %54, %1, %47 : vector<1x8x32xi1>, vector<1x8x32xf32>
    %c0_19 = arith.constant 0 : index
    %c0_20 = arith.constant 0 : index
    %c0_21 = arith.constant 0 : index
    %56 = vector.load %arg8[%c0_19, %c0_20, %c0_21] : memref<1x8x32xf32, #tpu.memory_space<vmem>>, vector<1x8x32xf32>
    tpu.vector_store %arg8[%c0_19, %c0_20, %c0_21], %55 {strides = array<i32>} : memref<1x8x32xf32, #tpu.memory_space<vmem>>, vector<1x8x32xf32>,
    %c0_22 = arith.constant 0 : index
    %c0_23 = arith.constant 0 : index
    %c0_24 = arith.constant 0 : index
    %57 = vector.load %arg9[%c0_22, %c0_23, %c0_24] : memref<1x8x8xf32, #tpu.memory_space<vmem>>, vector<1x8x8xf32>
    tpu.vector_store %arg9[%c0_22, %c0_23, %c0_24], %34 {strides = array<i32>} : memref<1x8x8xf32, #tpu.memory_space<vmem>>, vector<1x8x8xf32>,
    return
  }
  func.func @transform_0(%arg0: i32, %arg1: i32) -> (i32, i32, i32) {
    %c0_i32 = arith.constant 0 : i32
    %c0_i32_0 = arith.constant 0 : i32
    %c0_i32_1 = arith.constant 0 : i32
    return %arg0, %c0_i32, %c0_i32_0 : i32, i32, i32
  }
  func.func @transform_1(%arg0: i32, %arg1: i32) -> (i32, i32) {
    %c0_i32 = arith.constant 0 : i32
    %c0_i32_0 = arith.constant 0 : i32
    %c0_i32_1 = arith.constant 0 : i32
    return %c0_i32, %c0_i32_0 : i32, i32
  }
  func.func @transform_2(%arg0: i32, %arg1: i32) -> (i32, i32) {
    %c0_i32 = arith.constant 0 : i32
    %c0_i32_0 = arith.constant 0 : i32
    %c0_i32_1 = arith.constant 0 : i32
    return %c0_i32, %c0_i32_0 : i32, i32
  }
  func.func @transform_3(%arg0: i32, %arg1: i32) -> (i32, i32) {
    %c0_i32 = arith.constant 0 : i32
    %c0_i32_0 = arith.constant 0 : i32
    %c0_i32_1 = arith.constant 0 : i32
    return %c0_i32, %c0_i32_0 : i32, i32
  }
  func.func @transform_4(%arg0: i32, %arg1: i32) -> (i32, i32) {
    %c0_i32 = arith.constant 0 : i32
    %c0_i32_0 = arith.constant 0 : i32
    %c0_i32_1 = arith.constant 0 : i32
    return %c0_i32, %c0_i32_0 : i32, i32
  }
  func.func @transform_5(%arg0: i32, %arg1: i32) -> (i32, i32) {
    %c0_i32 = arith.constant 0 : i32
    %c0_i32_0 = arith.constant 0 : i32
    %c0_i32_1 = arith.constant 0 : i32
    return %c0_i32, %c0_i32_0 : i32, i32
  }
  func.func @transform_6(%arg0: i32, %arg1: i32) -> (i32, i32, i32) {
    %c0_i32 = arith.constant 0 : i32
    %c0_i32_0 = arith.constant 0 : i32
    return %arg0, %arg1, %c0_i32 : i32, i32, i32
  }
  func.func @transform_7(%arg0: i32, %arg1: i32) -> (i32, i32, i32) {
    %c0_i32 = arith.constant 0 : i32
    %c0_i32_0 = arith.constant 0 : i32
    return %arg0, %arg1, %c0_i32 : i32, i32, i32
  }
}

</mosaic_0001>

<llo_original>
// kernel: tpu_custom_call.1
$region0: #{tpu_custom_call.1}
  #allocation0 [shape = 'u32[]', space=smem, size = 0x4, offset = 0x4, fixed_abs, tag = 'smem constant byte address 0x4 - core index']
  #allocation1 [shape = 'u32[144,128]{1,0:T(1,128)}', space=vmem, size = 0x12000, scoped, tag = 'internal scratch']
  %s0 = inlined_call_operand.hbm [shape: f32[2,8,32], index: 0, kind: input, shape index: {}]
  %s1 = inlined_call_operand.hbm [shape: f32[32,32], index: 1, kind: input, shape index: {}]
  %s2 = inlined_call_operand.vmem [shape: f32[1,32], index: 2, kind: input, shape index: {}]
  %s3 = inlined_call_operand.hbm [shape: f32[32,32], index: 3, kind: input, shape index: {}]
  %s4 = inlined_call_operand.hbm [shape: f32[32,32], index: 4, kind: input, shape index: {}]
  %s5 = inlined_call_operand.vmem [shape: f32[1,32], index: 5, kind: input, shape index: {}]
  %s6 = inlined_call_operand.hbm [shape: f32[2,8,32], index: 6, kind: output, shape index: {0}]
  %s7 = inlined_call_operand.hbm [shape: f32[2,8,8], index: 7, kind: output, shape index: {1}]
  %8 = xla_tuple %s6, %s7
  %s9 = sld [smem:[#allocation0]]
  $region81: #{tpu_custom_call.1} parent=0
    _
  %s11 = ssub.s32 1, %s9
  %s12 = scalar_select 0, %s11, %s9
  $region1: #{tpu_custom_call.1} parent=0
    #allocation2 [shape = 'u8[8192]{0}', space=vmem, size = 0x2000, scoped, tag = 'input window, operand 0']
    #allocation3 [shape = 's32[2]{0}', space=sflag, size = 0x8, scoped, tag = 'scoped memory for tpu_custom_call.1']
    #allocation4 [shape = 's32[2]{0}', space=sflag, size = 0x8, scoped, tag = 'scoped memory for tpu_custom_call.1']
    #allocation5 [shape = 'u8[16384]{0}', space=vmem, size = 0x4000, scoped, tag = 'input window, operand 1, single buffered']
    #allocation6 [shape = 's32[1]{0}', space=sflag, size = 0x4, scoped, tag = 'scoped memory for tpu_custom_call.1']
    #allocation7 [shape = 'u8[16384]{0}', space=vmem, size = 0x4000, scoped, tag = 'input window, operand 3, single buffered']
    #allocation8 [shape = 'u8[16384]{0}', space=vmem, size = 0x4000, scoped, tag = 'input window, operand 4, single buffered']
    #allocation9 [shape = 's32[1]{0}', space=sflag, size = 0x4, scoped, tag = 'scoped memory for tpu_custom_call.1']
    #allocation10 [shape = 'u8[8192]{0}', space=vmem, size = 0x2000, scoped, tag = 'output window, operand 0']
    #allocation11 [shape = 'u8[8192]{0}', space=vmem, size = 0x2000, scoped, tag = 'output window, operand 1']
    #allocation12 [shape = 's32[2]{0}', space=sflag, size = 0x8, scoped, tag = 'scoped memory for tpu_custom_call.1']
    %13 = vsyncpa [#allocation3], 0
    %s14 = scalar_lea.sflag [#allocation3], 1
    %15 = vsyncpa %s14, 0
    %16 = vsyncpa [#allocation6], 0
    %17 = vsyncpa [#allocation9], 0
    %18 = vsyncpa [#allocation4], 0
    %s19 = scalar_lea.sflag [#allocation4], 1
    %20 = vsyncpa %s19, 0
    %21 = vsyncpa [#allocation12], 0
    %s22 = scalar_lea.sflag [#allocation12], 1
    %23 = vsyncpa %s22, 0
    loop: start=0, step=1, limit=4
    $region2: #{tpu_custom_call.1} parent=1 // loop_pre_header
      _
    $region3: #{tpu_custom_call.1} parent=1 // loop_header
      %s25 = sphi 0, %s29
      %p26 = scmp.ge.s32.totalorder %s25, 4
      %s32 = sphi 0, %s44
      %s33 = sphi 0, %s40
      %s34 = sphi 0, %s32
      %s35 = sphi 0, %s33
      %s36 = sphi 0, %s34
      %s37 = sphi 0, %s35
      %s47 = sphi 0, %s49
      %s50 = sphi 0, %s47
      %s51 = sphi 0, %s50
      %s67 = sphi 0, %s51
      %s71 = sphi 0, %s71
      %s73 = sphi 0, %s71
      %s74 = sphi 0, %s73
      %s88 = sphi 0, %s74
      %s92 = sphi 0, %s92
      %s94 = sphi 0, %s92
      %s95 = sphi 0, %s94
      %s109 = sphi 0, %s95
      %s113 = sphi 0, %s113
      %s115 = sphi 0, %s113
      %s116 = sphi 0, %s115
      %s130 = sphi 0, %s116
      %s134 = sphi 0, %s134
      %s136 = sphi 0, %s134
      %s137 = sphi 0, %s136
      %s151 = sphi 0, %s137
      %s155 = sphi 0, %s155
      %s157 = sphi 0, %s155
      %s158 = sphi 0, %s157
      %s172 = sphi 0, %s158
      %s180 = sphi 0, %s182
      %s183 = sphi 0, %s180
      %s184 = sphi 0, %s183
      %s200 = sphi 0, %s184
      %s208 = sphi 0, %s210
      %s211 = sphi 0, %s208
      %s212 = sphi 0, %s211
      %s228 = sphi 0, %s212
    $region4: #{tpu_custom_call.1} parent=1 // loop_header_branch
      %28 = sbr.rel (%p26) target = $region8
    $region5: #{tpu_custom_call.1} parent=1 // loop_body
      %s30 = ssub.s32 %s25, 1
      %s31 = ssub.s32 %s25, 2
      %s38 = sadd.s32 1, %s33
      %p39 = scmp.ge.s32.totalorder %s38, 1
      %s40 = scalar_select %p39, 0, %s38
      %s41 = sadd.s32 1, %s32
      %s42 = scalar_select %p39, %s41, %s32
      %p43 = scmp.ge.s32.totalorder %s42, 2
      %s44 = scalar_select %p43, 0, %s42
      %s45 = ssub.s32 %s32, %s44
      %p46 = scmp.eq.s32.totalorder %s45, 0
      %s48 = sadd.s32 %s47, 1
      %s49 = scalar_select %p46, %s47, %s48
      %p52 = pneg %p46
      %p53 = scmp.eq.s32.totalorder %s25, 1
      %p54 = por %p52, %p53
      %p55 = scmp.ne.s32.totalorder %s47, %s50
      %p56 = scmp.eq.s32.totalorder %s25, 0
      %p57 = por %p55, %p56
      %p58 = scmp.ne.s32.totalorder %s47, %s50
      %p59 = scmp.eq.s32.totalorder %s30, 1
      %p60 = por %p58, %p59
      %p61 = scmp.ne.s32.totalorder %s50, %s51
      %p62 = scmp.eq.s32.totalorder %s30, 0
      %p63 = por %p61, %p62
      %p64 = scmp.ne.s32.totalorder %s50, %s51
      %p65 = scmp.eq.s32.totalorder %s31, 1
      %p66 = por %p64, %p65
      %p68 = scmp.ne.s32.totalorder %s51, %s67
      %p69 = scmp.eq.s32.totalorder %s31, 0
      %p70 = por %p68, %p69
      %s72 = sadd.s32 %s71, 1
      %p75 = scmp.eq.s32.totalorder %s25, 1
      %p76 = scmp.ne.s32.totalorder %s71, %s73
      %p77 = scmp.eq.s32.totalorder %s25, 0
      %p78 = por %p76, %p77
      %p79 = scmp.ne.s32.totalorder %s71, %s73
      %p80 = scmp.eq.s32.totalorder %s30, 1
      %p81 = por %p79, %p80
      %p82 = scmp.ne.s32.totalorder %s73, %s74
      %p83 = scmp.eq.s32.totalorder %s30, 0
      %p84 = por %p82, %p83
      %p85 = scmp.ne.s32.totalorder %s73, %s74
      %p86 = scmp.eq.s32.totalorder %s31, 1
      %p87 = por %p85, %p86
      %p89 = scmp.ne.s32.totalorder %s74, %s88
      %p90 = scmp.eq.s32.totalorder %s31, 0
      %p91 = por %p89, %p90
      %s93 = sadd.s32 %s92, 1
      %p96 = scmp.eq.s32.totalorder %s25, 1
      %p97 = scmp.ne.s32.totalorder %s92, %s94
      %p98 = scmp.eq.s32.totalorder %s25, 0
      %p99 = por %p97, %p98
      %p100 = scmp.ne.s32.totalorder %s92, %s94
      %p101 = scmp.eq.s32.totalorder %s30, 1
      %p102 = por %p100, %p101
      %p103 = scmp.ne.s32.totalorder %s94, %s95
      %p104 = scmp.eq.s32.totalorder %s30, 0
      %p105 = por %p103, %p104
      %p106 = scmp.ne.s32.totalorder %s94, %s95
      %p107 = scmp.eq.s32.totalorder %s31, 1
      %p108 = por %p106, %p107
      %p110 = scmp.ne.s32.totalorder %s95, %s109
      %p111 = scmp.eq.s32.totalorder %s31, 0
      %p112 = por %p110, %p111
      %s114 = sadd.s32 %s113, 1
      %p117 = scmp.eq.s32.totalorder %s25, 1
      %p118 = scmp.ne.s32.totalorder %s113, %s115
      %p119 = scmp.eq.s32.totalorder %s25, 0
      %p120 = por %p118, %p119
      %p121 = scmp.ne.s32.totalorder %s113, %s115
      %p122 = scmp.eq.s32.totalorder %s30, 1
      %p123 = por %p121, %p122
      %p124 = scmp.ne.s32.totalorder %s115, %s116
      %p125 = scmp.eq.s32.totalorder %s30, 0
      %p126 = por %p124, %p125
      %p127 = scmp.ne.s32.totalorder %s115, %s116
      %p128 = scmp.eq.s32.totalorder %s31, 1
      %p129 = por %p127, %p128
      %p131 = scmp.ne.s32.totalorder %s116, %s130
      %p132 = scmp.eq.s32.totalorder %s31, 0
      %p133 = por %p131, %p132
      %s135 = sadd.s32 %s134, 1
      %p138 = scmp.eq.s32.totalorder %s25, 1
      %p139 = scmp.ne.s32.totalorder %s134, %s136
      %p140 = scmp.eq.s32.totalorder %s25, 0
      %p141 = por %p139, %p140
      %p142 = scmp.ne.s32.totalorder %s134, %s136
      %p143 = scmp.eq.s32.totalorder %s30, 1
      %p144 = por %p142, %p143
      %p145 = scmp.ne.s32.totalorder %s136, %s137
      %p146 = scmp.eq.s32.totalorder %s30, 0
      %p147 = por %p145, %p146
      %p148 = scmp.ne.s32.totalorder %s136, %s137
      %p149 = scmp.eq.s32.totalorder %s31, 1
      %p150 = por %p148, %p149
      %p152 = scmp.ne.s32.totalorder %s137, %s151
      %p153 = scmp.eq.s32.totalorder %s31, 0
      %p154 = por %p152, %p153
      %s156 = sadd.s32 %s155, 1
      %p159 = scmp.eq.s32.totalorder %s25, 1
      %p160 = scmp.ne.s32.totalorder %s155, %s157
      %p161 = scmp.eq.s32.totalorder %s25, 0
      %p162 = por %p160, %p161
      %p163 = scmp.ne.s32.totalorder %s155, %s157
      %p164 = scmp.eq.s32.totalorder %s30, 1
      %p165 = por %p163, %p164
      %p166 = scmp.ne.s32.totalorder %s157, %s158
      %p167 = scmp.eq.s32.totalorder %s30, 0
      %p168 = por %p166, %p167
      %p169 = scmp.ne.s32.totalorder %s157, %s158
      %p170 = scmp.eq.s32.totalorder %s31, 1
      %p171 = por %p169, %p170
      %p173 = scmp.ne.s32.totalorder %s158, %s172
      %p174 = scmp.eq.s32.totalorder %s31, 0
      %p175 = por %p173, %p174
      %s176 = ssub.s32 %s32, %s44
      %s177 = ssub.s32 %s33, %s40
      %s178 = sor.u32 %s176, %s177
      %p179 = scmp.eq.s32.totalorder %s178, 0
      %s181 = sadd.s32 %s180, 1
      %s182 = scalar_select %p179, %s180, %s181
      %p185 = pneg %p179
      %p186 = scmp.eq.s32.totalorder %s25, 1
      %p187 = por %p185, %p186
      %p188 = scmp.ne.s32.totalorder %s180, %s183
      %p189 = scmp.eq.s32.totalorder %s25, 0
      %p190 = por %p188, %p189
      %p191 = scmp.ne.s32.totalorder %s180, %s183
      %p192 = scmp.eq.s32.totalorder %s30, 1
      %p193 = por %p191, %p192
      %p194 = scmp.ne.s32.totalorder %s183, %s184
      %p195 = scmp.eq.s32.totalorder %s30, 0
      %p196 = por %p194, %p195
      %p197 = scmp.ne.s32.totalorder %s183, %s184
      %p198 = scmp.eq.s32.totalorder %s31, 1
      %p199 = por %p197, %p198
      %p201 = scmp.ne.s32.totalorder %s184, %s200
      %p202 = scmp.eq.s32.totalorder %s31, 0
      %p203 = por %p201, %p202
      %s204 = ssub.s32 %s32, %s44
      %s205 = ssub.s32 %s33, %s40
      %s206 = sor.u32 %s204, %s205
      %p207 = scmp.eq.s32.totalorder %s206, 0
      %s209 = sadd.s32 %s208, 1
      %s210 = scalar_select %p207, %s208, %s209
      %p213 = pneg %p207
      %p214 = scmp.eq.s32.totalorder %s25, 1
      %p215 = por %p213, %p214
      %p216 = scmp.ne.s32.totalorder %s208, %s211
      %p217 = scmp.eq.s32.totalorder %s25, 0
      %p218 = por %p216, %p217
      %p219 = scmp.ne.s32.totalorder %s208, %s211
      %p220 = scmp.eq.s32.totalorder %s30, 1
      %p221 = por %p219, %p220
      %p222 = scmp.ne.s32.totalorder %s211, %s212
      %p223 = scmp.eq.s32.totalorder %s30, 0
      %p224 = por %p222, %p223
      %p225 = scmp.ne.s32.totalorder %s211, %s212
      %p226 = scmp.eq.s32.totalorder %s31, 1
      %p227 = por %p225, %p226
      %p229 = scmp.ne.s32.totalorder %s212, %s228
      %p230 = scmp.eq.s32.totalorder %s31, 0
      %p231 = por %p229, %p230
      %p232 = scmp.le.s32.totalorder 1, %s25
      %p233 = scmp.lt.s32.totalorder %s25, 3
      %p234 = pnand %p232, %p233
      %p235 = pneg %p234
      // Predicated region
      $region9: #{tpu_custom_call.1} parent=5 // pred_check
        _
      $region10: #{tpu_custom_call.1} parent=5 // pred_check_branch
        %237 = sbr.rel (%p234) target = $region12
      $region11: #{tpu_custom_call.1} parent=5 // pred_region
        %s238 = ssub.s32 %s25, 1
        // Predicated region
        $region13: #{tpu_custom_call.1} parent=11 // pred_check
          %p239 = pneg %p84
        $region14: #{tpu_custom_call.1} parent=11 // pred_check_branch
          %241 = sbr.rel (%p239) target = $region16
        $region15: #{tpu_custom_call.1} parent=11 // pred_region
          %s243 = ssub.s32 512, 512
          %244 = vsyncadd [#allocation6], %s243
          %s245 = sshll.u32 [#allocation5], 4
          %s246 = int_to_ptr.vmem [resolvable:$true] %s245
          %251 = dma.hbm_to_vmem [thread:$0]  %s1, 512, %s246, [#allocation6], 128, 128, 8
        $region16: #{tpu_custom_call.1} parent=11 // pred_fallthru
          _
        // Predicated region
        $region17: #{tpu_custom_call.1} parent=11 // pred_check
          %p252 = pneg %p105
        $region18: #{tpu_custom_call.1} parent=11 // pred_check_branch
          %254 = sbr.rel (%p252) target = $region20
        $region19: #{tpu_custom_call.1} parent=11 // pred_region
          _
        $region20: #{tpu_custom_call.1} parent=11 // pred_fallthru
          _
        // Predicated region
        $region21: #{tpu_custom_call.1} parent=11 // pred_check
          %p255 = pneg %p126
        $region22: #{tpu_custom_call.1} parent=11 // pred_check_branch
          %257 = sbr.rel (%p255) target = $region24
        $region23: #{tpu_custom_call.1} parent=11 // pred_region
          %s259 = ssub.s32 512, 512
          %260 = vsyncadd [#allocation6], %s259
          %s261 = sshll.u32 [#allocation7], 4
          %s262 = int_to_ptr.vmem [resolvable:$true] %s261
          %267 = dma.hbm_to_vmem [thread:$0]  %s3, 512, %s262, [#allocation6], 128, 128, 8
        $region24: #{tpu_custom_call.1} parent=11 // pred_fallthru
          _
        // Predicated region
        $region25: #{tpu_custom_call.1} parent=11 // pred_check
          %p268 = pneg %p147
        $region26: #{tpu_custom_call.1} parent=11 // pred_check_branch
          %270 = sbr.rel (%p268) target = $region28
        $region27: #{tpu_custom_call.1} parent=11 // pred_region
          %s272 = ssub.s32 512, 512
          %273 = vsyncadd [#allocation9], %s272
          %s274 = sshll.u32 [#allocation8], 4
          %s275 = int_to_ptr.vmem [resolvable:$true] %s274
          %280 = dma.hbm_to_vmem [thread:$0]  %s4, 512, %s275, [#allocation9], 128, 128, 8
        $region28: #{tpu_custom_call.1} parent=11 // pred_fallthru
          _
        // Predicated region
        $region29: #{tpu_custom_call.1} parent=11 // pred_check
          %p281 = pneg %p168
        $region30: #{tpu_custom_call.1} parent=11 // pred_check_branch
          %283 = sbr.rel (%p281) target = $region32
        $region31: #{tpu_custom_call.1} parent=11 // pred_region
          _
        $region32: #{tpu_custom_call.1} parent=11 // pred_fallthru
          _
      $region12: #{tpu_custom_call.1} parent=5 // pred_fallthru
        _
      %p284 = scmp.lt.s32.totalorder %s25, 2
      // Predicated region
      $region33: #{tpu_custom_call.1} parent=5 // pred_check
        %p285 = pneg %p284
      $region34: #{tpu_custom_call.1} parent=5 // pred_check_branch
        %287 = sbr.rel (%p285) target = $region36
      $region35: #{tpu_custom_call.1} parent=5 // pred_region
        // Predicated region
        $region37: #{tpu_custom_call.1} parent=35 // pred_check
          %p288 = pneg %p57
        $region38: #{tpu_custom_call.1} parent=35 // pred_check_branch
          %290 = sbr.rel (%p288) target = $region40
        $region39: #{tpu_custom_call.1} parent=35 // pred_region
          %s291 = sand.u32 %s47, 1
          %s292 = scalar_lea.sflag [#allocation3], %s291
          %s293 = sand.u32 %s47, 1
          %s294 = smul.addr %s293, 8
          %s295 = scalar_lea.vmem [#allocation2], %s294
          %s297 = ssub.s32 128, 128
          %298 = vsyncadd %s292, %s297
          %s299 = smul.addr %s32, 128
          %s300 = scalar_lea.hbm %s0, %s299
          %s302 = sshll.u32 %s295, 4
          %s303 = int_to_ptr.vmem [resolvable:$true] %s302
          %305 = dma.hbm_to_vmem [thread:$0]  %s300, 128, %s303, %s292
        $region40: #{tpu_custom_call.1} parent=35 // pred_fallthru
          _
      $region36: #{tpu_custom_call.1} parent=5 // pred_fallthru
        _
      %p306 = scmp.le.s32.totalorder 1, %s25
      %p307 = scmp.lt.s32.totalorder %s25, 3
      %p308 = pnand %p306, %p307
      %p309 = pneg %p308
      // Predicated region
      $region41: #{tpu_custom_call.1} parent=5 // pred_check
        _
      $region42: #{tpu_custom_call.1} parent=5 // pred_check_branch
        %311 = sbr.rel (%p308) target = $region44
      $region43: #{tpu_custom_call.1} parent=5 // pred_region
        %s312 = ssub.s32 %s25, 1
        %s313 = sand.u32 %s50, 1
        %s314 = scalar_lea.sflag [#allocation3], %s313
        %s315 = sand.u32 %s50, 1
        %s316 = smul.addr %s315, 8
        %s317 = scalar_lea.vmem [#allocation2], %s316
        // Predicated region
        $region45: #{tpu_custom_call.1} parent=43 // pred_check
          %p318 = pneg %p63
        $region46: #{tpu_custom_call.1} parent=43 // pred_check_branch
          %320 = sbr.rel (%p318) target = $region48
        $region47: #{tpu_custom_call.1} parent=43 // pred_region
          %321 = dma.done %s314, 128
        $region48: #{tpu_custom_call.1} parent=43 // pred_fallthru
          _
        // Predicated region
        $region49: #{tpu_custom_call.1} parent=43 // pred_check
          %p322 = pneg %p84
        $region50: #{tpu_custom_call.1} parent=43 // pred_check_branch
          %324 = sbr.rel (%p322) target = $region52
        $region51: #{tpu_custom_call.1} parent=43 // pred_region
          %325 = dma.done [#allocation6], 512
        $region52: #{tpu_custom_call.1} parent=43 // pred_fallthru
          _
        // Predicated region
        $region53: #{tpu_custom_call.1} parent=43 // pred_check
          %p326 = pneg %p126
        $region54: #{tpu_custom_call.1} parent=43 // pred_check_branch
          %328 = sbr.rel (%p326) target = $region56
        $region55: #{tpu_custom_call.1} parent=43 // pred_region
          %329 = dma.done [#allocation6], 512
        $region56: #{tpu_custom_call.1} parent=43 // pred_fallthru
          _
        // Predicated region
        $region57: #{tpu_custom_call.1} parent=43 // pred_check
          %p330 = pneg %p147
        $region58: #{tpu_custom_call.1} parent=43 // pred_check_branch
          %332 = sbr.rel (%p330) target = $region60
        $region59: #{tpu_custom_call.1} parent=43 // pred_region
          %333 = dma.done [#allocation9], 512
        $region60: #{tpu_custom_call.1} parent=43 // pred_fallthru
          _
        %s334 = sand.u32 %s50, 1
        %s335 = scalar_lea.sflag [#allocation3], %s334
        %s336 = sand.u32 %s50, 1
        %s337 = smul.addr %s336, 8
        %s338 = scalar_lea.vmem [#allocation2], %s337
        %p339 = pneg %p63
        %p340 = pneg %p60
        %p341 = pneg %p84
        %p342 = pneg %p81
        %p343 = pneg %p105
        %p344 = pneg %p102
        %p345 = pneg %p126
        %p346 = pneg %p123
        %p347 = pneg %p147
        %p348 = pneg %p144
        %p349 = pneg %p168
        %p350 = pneg %p165
        %p351 = pneg %p196
        %p352 = pneg %p193
        %s353 = sand.u32 %s183, 1
        %s354 = scalar_lea.sflag [#allocation4], %s353
        %s355 = sand.u32 %s183, 1
        %s356 = smul.addr %s355, 8
        %s357 = scalar_lea.vmem [#allocation10], %s356
        %p358 = pneg %p224
        %p359 = pneg %p221
        %s360 = sand.u32 %s211, 1
        %s361 = scalar_lea.sflag [#allocation12], %s360
        %s362 = sand.u32 %s211, 1
        %s363 = smul.addr %s362, 8
        %s364 = scalar_lea.vmem [#allocation11], %s363
        %s365 = smul.u32 %s35, 8
        %v366 = vld [vmem:[%s317] sm:$0xff]
        %v367 = vld [vmem:[#allocation5] sm:$0xff]
        %v368 = vld [vmem:[#allocation5 + $0x8] sm:$0xff]
        %v369 = vld [vmem:[#allocation5 + $0x10] sm:$0xff]
        %v370 = vld [vmem:[#allocation5 + $0x18] sm:$0xff]
        %vm371 = vcmask 261120
        %v373 = vsel %vm371, %v366, 0
        %375 = vmatprep.subr.mxu0 0.0
        %376 = vmatpush1.msra.mxu0 0.0
        %377 = vmatprep.subr.mxu0 0.0
        %378 = vmatpush1.msra.mxu0 0.0
        %379 = vmatprep.subr.mxu0 0.0
        %380 = vmatpush1.msra.mxu0 0.0
        %381 = vmatprep.subr.mxu0 0.0
        %382 = vmatpush1.msra.mxu0 0.0
        %383 = vmatprep.subr.mxu0 0.0
        %384 = vmatpush1.msra.mxu0 0.0
        %385 = vmatprep.subr.mxu0 0.0
        %386 = vmatpush1.msra.mxu0 0.0
        %387 = vmatprep.subr.mxu0 0.0
        %388 = vmatpush1.msra.mxu0 0.0
        %389 = vmatprep.subr.mxu0 0.0
        %390 = vmatpush1.msra.mxu0 0.0
        %391 = vmatprep.subr.mxu0 0.0
        %392 = vmatpush1.msra.mxu0 0.0
        %393 = vmatprep.subr.mxu0 0.0
        %394 = vmatpush1.msra.mxu0 0.0
        %395 = vmatprep.subr.mxu0 0.0
        %396 = vmatpush1.msra.mxu0 0.0
        %397 = vmatprep.subr.mxu0 0.0
        %398 = vmatpush1.msra.mxu0 0.0
        %399 = vmatprep.subr.mxu0 0.0
        %400 = vmatpush1.msra.mxu0 %v370
        %401 = vmatprep.subr.mxu0 0.0
        %402 = vmatpush1.msra.mxu0 %v369
        %403 = vmatprep.subr.mxu0 0.0
        %404 = vmatpush1.msra.mxu0 %v368
        %405 = vmatprep.subr.mxu0 0.0
        %406 = vmatpush1.msra.mxu0 %v367
        %407 = vmatprep.subr.mxu0 0.0
        %408 = vmatpush2.msra.mxu0 0.0
        %409 = vmatprep.subr.mxu0 0.0
        %410 = vmatpush2.msra.mxu0 0.0
        %411 = vmatprep.subr.mxu0 0.0
        %412 = vmatpush2.msra.mxu0 0.0
        %413 = vmatprep.subr.mxu0 0.0
        %414 = vmatpush2.msra.mxu0 0.0
        %415 = vmatprep.subr.mxu0 0.0
        %416 = vmatpush2.msra.mxu0 0.0
        %417 = vmatprep.subr.mxu0 0.0
        %418 = vmatpush2.msra.mxu0 0.0
        %419 = vmatprep.subr.mxu0 0.0
        %420 = vmatpush2.msra.mxu0 0.0
        %421 = vmatprep.subr.mxu0 0.0
        %422 = vmatpush2.msra.mxu0 0.0
        %423 = vmatprep.subr.mxu0 0.0
        %424 = vmatpush2.msra.mxu0 0.0
        %425 = vmatprep.subr.mxu0 0.0
        %426 = vmatpush2.msra.mxu0 0.0
        %427 = vmatprep.subr.mxu0 0.0
        %428 = vmatpush2.msra.mxu0 0.0
        %429 = vmatprep.subr.mxu0 0.0
        %430 = vmatpush2.msra.mxu0 0.0
        %431 = vmatprep.subr.mxu0 0.0
        %432 = vmatpush2.msra.mxu0 0.0
        %433 = vmatprep.subr.mxu0 0.0
        %434 = vmatpush2.msra.mxu0 0.0
        %435 = vmatprep.subr.mxu0 0.0
        %436 = vmatpush2.msra.mxu0 0.0
        %437 = vmatprep.subr.mxu0 0.0
        %438 = vmatpush2.msra.mxu0 0.0
        %439 = vmatprep.mubr.f32.mxu0 0.0
        %440 = vmatmul.mubr.f32.gmra.mxu0 %v373
        %v441 = vpop.f32.mrf.mxu0
        %v442 = vadd.f32 0.0, %v441
        %v443 = vpop.f32.mrf.mxu0
        %444 = vdwg.mxu0
        %v445 = vtanh.pop %v442
        %v446 = vld [vmem:[%s2] sm:$0x1]
        %v448 = vlaneseq
        %v449 = vshrl.u32 %v448, 7
        %v450 = vsub.s32 0, %v449
        %v451 = vrot.slane %v446, %v450
        %v453 = vmul.f32 %v445, %v451
        %v454 = vsel %vm371, %v453, 0.0
        %455 = vadd.xlane.f32.xlu0 %v454
        %v456 = vpop.xlane.xlu0 %455
        %v457 = vlaneseq
        %v458 = vshrl.u32 %v457, 7
        %v459 = vstv %s365
        %v460 = vadd.s32 %v459, %v458
        %v461 = vlaneseq
        %v462 = vand.u32 %v461, 127
        %vm463 = vcmp.gt.s32.totalorder %v460, 1
        %v464 = vsel %vm463, %v460, 1
        %vm465 = vcmp.lt.s32.totalorder %v462, %v464
        %v467 = vlaneseq
        %v468 = vshrl.u32 %v467, 7
        %v469 = vsub.s32 %v462, %v468
        %v470 = vrot.slane %v456, %v469
        %vm471 = vcmask 1042434
        %v472 = vsel %vm471, %v470, %v470
        %vm473 = vcmask 1043459
        %v474 = vsel %vm473, %v470, %v472
        %vm475 = vcmask 1044484
        %v476 = vsel %vm475, %v470, %v474
        %vm477 = vcmask 1045509
        %v478 = vsel %vm477, %v470, %v476
        %vm479 = vcmask 1046534
        %v480 = vsel %vm479, %v470, %v478
        %vm481 = vcmask 1047559
        %v482 = vsel %vm481, %v470, %v480
        %v484 = vsel %vm465, %v482, -1e+30
        %vm485 = vcmask 64512
        %v486 = vsel %vm485, %v484, -inf
        %487 = vmax.xlane.f32.xlu0 %v486
        %v488 = vpop.xlane.xlu0 %487
        %v489 = vsub.f32 %v484, %v488
        %v490 = vmul.f32 %v489, 1.442695
        %v491 = vpow.pop %v490
        %v492 = vsel %vm485, %v491, 0.0
        %493 = vadd.xlane.f32.xlu0 %v492
        %v494 = vpop.xlane.xlu0 %493
        %v495 = vrcp.pop %v494
        %v496 = vmul.f32 %v491, %v495
        %v498 = vsel %vm485, %v496, 0
        %500 = vmatprep.subr.mxu0 0.0
        %501 = vmatpush1.msra.mxu0 0.0
        %502 = vmatprep.subr.mxu0 0.0
        %503 = vmatpush1.msra.mxu0 0.0
        %504 = vmatprep.subr.mxu0 0.0
        %505 = vmatpush1.msra.mxu0 0.0
        %506 = vmatprep.subr.mxu0 0.0
        %507 = vmatpush1.msra.mxu0 0.0
        %508 = vmatprep.subr.mxu0 0.0
        %509 = vmatpush1.msra.mxu0 0.0
        %510 = vmatprep.subr.mxu0 0.0
        %511 = vmatpush1.msra.mxu0 0.0
        %512 = vmatprep.subr.mxu0 0.0
        %513 = vmatpush1.msra.mxu0 0.0
        %514 = vmatprep.subr.mxu0 0.0
        %515 = vmatpush1.msra.mxu0 0.0
        %516 = vmatprep.subr.mxu0 0.0
        %517 = vmatpush1.msra.mxu0 0.0
        %518 = vmatprep.subr.mxu0 0.0
        %519 = vmatpush1.msra.mxu0 0.0
        %520 = vmatprep.subr.mxu0 0.0
        %521 = vmatpush1.msra.mxu0 0.0
        %522 = vmatprep.subr.mxu0 0.0
        %523 = vmatpush1.msra.mxu0 0.0
        %524 = vmatprep.subr.mxu0 0.0
        %525 = vmatpush1.msra.mxu0 0.0
        %526 = vmatprep.subr.mxu0 0.0
        %527 = vmatpush1.msra.mxu0 0.0
        %528 = vmatprep.subr.mxu0 0.0
        %529 = vmatpush1.msra.mxu0 0.0
        %530 = vmatprep.subr.mxu0 0.0
        %531 = vmatpush1.msra.mxu0 %v366
        %532 = vmatprep.subr.mxu0 0.0
        %533 = vmatpush2.msra.mxu0 0.0
        %534 = vmatprep.subr.mxu0 0.0
        %535 = vmatpush2.msra.mxu0 0.0
        %536 = vmatprep.subr.mxu0 0.0
        %537 = vmatpush2.msra.mxu0 0.0
        %538 = vmatprep.subr.mxu0 0.0
        %539 = vmatpush2.msra.mxu0 0.0
        %540 = vmatprep.subr.mxu0 0.0
        %541 = vmatpush2.msra.mxu0 0.0
        %542 = vmatprep.subr.mxu0 0.0
        %543 = vmatpush2.msra.mxu0 0.0
        %544 = vmatprep.subr.mxu0 0.0
        %545 = vmatpush2.msra.mxu0 0.0
        %546 = vmatprep.subr.mxu0 0.0
        %547 = vmatpush2.msra.mxu0 0.0
        %548 = vmatprep.subr.mxu0 0.0
        %549 = vmatpush2.msra.mxu0 0.0
        %550 = vmatprep.subr.mxu0 0.0
        %551 = vmatpush2.msra.mxu0 0.0
        %552 = vmatprep.subr.mxu0 0.0
        %553 = vmatpush2.msra.mxu0 0.0
        %554 = vmatprep.subr.mxu0 0.0
        %555 = vmatpush2.msra.mxu0 0.0
        %556 = vmatprep.subr.mxu0 0.0
        %557 = vmatpush2.msra.mxu0 0.0
        %558 = vmatprep.subr.mxu0 0.0
        %559 = vmatpush2.msra.mxu0 0.0
        %560 = vmatprep.subr.mxu0 0.0
        %561 = vmatpush2.msra.mxu0 0.0
        %562 = vmatprep.subr.mxu0 0.0
        %563 = vmatpush2.msra.mxu0 0.0
        %564 = vmatprep.mubr.f32.mxu0 0.0
        %565 = vmatmul.mubr.f32.gmra.mxu0 %v498
        %v566 = vpop.f32.mrf.mxu0
        %v567 = vadd.f32 0.0, %v566
        %v568 = vpop.f32.mrf.mxu0
        %569 = vdwg.mxu0
        %v570 = vld [vmem:[#allocation7] sm:$0xff]
        %v571 = vld [vmem:[#allocation7 + $0x8] sm:$0xff]
        %v572 = vld [vmem:[#allocation7 + $0x10] sm:$0xff]
        %v573 = vld [vmem:[#allocation7 + $0x18] sm:$0xff]
        %v574 = vld [vmem:[#allocation8] sm:$0xff]
        %v575 = vld [vmem:[#allocation8 + $0x8] sm:$0xff]
        %v576 = vld [vmem:[#allocation8 + $0x10] sm:$0xff]
        %v577 = vld [vmem:[#allocation8 + $0x18] sm:$0xff]
        %v579 = vsel %vm371, %v567, 0
        %581 = vmatprep.subr.mxu0 0.0
        %582 = vmatpush1.msra.mxu0 0.0
        %583 = vmatprep.subr.mxu0 0.0
        %584 = vmatpush1.msra.mxu0 0.0
        %585 = vmatprep.subr.mxu0 0.0
        %586 = vmatpush1.msra.mxu0 0.0
        %587 = vmatprep.subr.mxu0 0.0
        %588 = vmatpush1.msra.mxu0 0.0
        %589 = vmatprep.subr.mxu0 0.0
        %590 = vmatpush1.msra.mxu0 0.0
        %591 = vmatprep.subr.mxu0 0.0
        %592 = vmatpush1.msra.mxu0 0.0
        %593 = vmatprep.subr.mxu0 0.0
        %594 = vmatpush1.msra.mxu0 0.0
        %595 = vmatprep.subr.mxu0 0.0
        %596 = vmatpush1.msra.mxu0 0.0
        %597 = vmatprep.subr.mxu0 0.0
        %598 = vmatpush1.msra.mxu0 0.0
        %599 = vmatprep.subr.mxu0 0.0
        %600 = vmatpush1.msra.mxu0 0.0
        %601 = vmatprep.subr.mxu0 0.0
        %602 = vmatpush1.msra.mxu0 0.0
        %603 = vmatprep.subr.mxu0 0.0
        %604 = vmatpush1.msra.mxu0 0.0
        %605 = vmatprep.subr.mxu0 0.0
        %606 = vmatpush1.msra.mxu0 %v577
        %607 = vmatprep.subr.mxu0 0.0
        %608 = vmatpush1.msra.mxu0 %v576
        %609 = vmatprep.subr.mxu0 0.0
        %610 = vmatpush1.msra.mxu0 %v575
        %611 = vmatprep.subr.mxu0 0.0
        %612 = vmatpush1.msra.mxu0 %v574
        %613 = vmatprep.subr.mxu0 0.0
        %614 = vmatpush2.msra.mxu0 0.0
        %615 = vmatprep.subr.mxu0 0.0
        %616 = vmatpush2.msra.mxu0 0.0
        %617 = vmatprep.subr.mxu0 0.0
        %618 = vmatpush2.msra.mxu0 0.0
        %619 = vmatprep.subr.mxu0 0.0
        %620 = vmatpush2.msra.mxu0 0.0
        %621 = vmatprep.subr.mxu0 0.0
        %622 = vmatpush2.msra.mxu0 0.0
        %623 = vmatprep.subr.mxu0 0.0
        %624 = vmatpush2.msra.mxu0 0.0
        %625 = vmatprep.subr.mxu0 0.0
        %626 = vmatpush2.msra.mxu0 0.0
        %627 = vmatprep.subr.mxu0 0.0
        %628 = vmatpush2.msra.mxu0 0.0
        %629 = vmatprep.subr.mxu0 0.0
        %630 = vmatpush2.msra.mxu0 0.0
        %631 = vmatprep.subr.mxu0 0.0
        %632 = vmatpush2.msra.mxu0 0.0
        %633 = vmatprep.subr.mxu0 0.0
        %634 = vmatpush2.msra.mxu0 0.0
        %635 = vmatprep.subr.mxu0 0.0
        %636 = vmatpush2.msra.mxu0 0.0
        %637 = vmatprep.subr.mxu0 0.0
        %638 = vmatpush2.msra.mxu0 0.0
        %639 = vmatprep.subr.mxu0 0.0
        %640 = vmatpush2.msra.mxu0 0.0
        %641 = vmatprep.subr.mxu0 0.0
        %642 = vmatpush2.msra.mxu0 0.0
        %643 = vmatprep.subr.mxu0 0.0
        %644 = vmatpush2.msra.mxu0 0.0
        %645 = vmatprep.mubr.f32.mxu0 0.0
        %646 = vmatmul.mubr.f32.gmra.mxu0 %v579
        %v647 = vpop.f32.mrf.mxu0
        %v648 = vadd.f32 0.0, %v647
        %v649 = vpop.f32.mrf.mxu0
        %650 = vdwg.mxu0
        %651 = vmatprep.subr.mxu0 0.0
        %652 = vmatpush1.msra.mxu0 0.0
        %653 = vmatprep.subr.mxu0 0.0
        %654 = vmatpush1.msra.mxu0 0.0
        %655 = vmatprep.subr.mxu0 0.0
        %656 = vmatpush1.msra.mxu0 0.0
        %657 = vmatprep.subr.mxu0 0.0
        %658 = vmatpush1.msra.mxu0 0.0
        %659 = vmatprep.subr.mxu0 0.0
        %660 = vmatpush1.msra.mxu0 0.0
        %661 = vmatprep.subr.mxu0 0.0
        %662 = vmatpush1.msra.mxu0 0.0
        %663 = vmatprep.subr.mxu0 0.0
        %664 = vmatpush1.msra.mxu0 0.0
        %665 = vmatprep.subr.mxu0 0.0
        %666 = vmatpush1.msra.mxu0 0.0
        %667 = vmatprep.subr.mxu0 0.0
        %668 = vmatpush1.msra.mxu0 0.0
        %669 = vmatprep.subr.mxu0 0.0
        %670 = vmatpush1.msra.mxu0 0.0
        %671 = vmatprep.subr.mxu0 0.0
        %672 = vmatpush1.msra.mxu0 0.0
        %673 = vmatprep.subr.mxu0 0.0
        %674 = vmatpush1.msra.mxu0 0.0
        %675 = vmatprep.subr.mxu0 0.0
        %676 = vmatpush1.msra.mxu0 %v573
        %677 = vmatprep.subr.mxu0 0.0
        %678 = vmatpush1.msra.mxu0 %v572
        %679 = vmatprep.subr.mxu0 0.0
        %680 = vmatpush1.msra.mxu0 %v571
        %681 = vmatprep.subr.mxu0 0.0
        %682 = vmatpush1.msra.mxu0 %v570
        %683 = vmatprep.subr.mxu0 0.0
        %684 = vmatpush2.msra.mxu0 0.0
        %685 = vmatprep.subr.mxu0 0.0
        %686 = vmatpush2.msra.mxu0 0.0
        %687 = vmatprep.subr.mxu0 0.0
        %688 = vmatpush2.msra.mxu0 0.0
        %689 = vmatprep.subr.mxu0 0.0
        %690 = vmatpush2.msra.mxu0 0.0
        %691 = vmatprep.subr.mxu0 0.0
        %692 = vmatpush2.msra.mxu0 0.0
        %693 = vmatprep.subr.mxu0 0.0
        %694 = vmatpush2.msra.mxu0 0.0
        %695 = vmatprep.subr.mxu0 0.0
        %696 = vmatpush2.msra.mxu0 0.0
        %697 = vmatprep.subr.mxu0 0.0
        %698 = vmatpush2.msra.mxu0 0.0
        %699 = vmatprep.subr.mxu0 0.0
        %700 = vmatpush2.msra.mxu0 0.0
        %701 = vmatprep.subr.mxu0 0.0
        %702 = vmatpush2.msra.mxu0 0.0
        %703 = vmatprep.subr.mxu0 0.0
        %704 = vmatpush2.msra.mxu0 0.0
        %705 = vmatprep.subr.mxu0 0.0
        %706 = vmatpush2.msra.mxu0 0.0
        %707 = vmatprep.subr.mxu0 0.0
        %708 = vmatpush2.msra.mxu0 0.0
        %709 = vmatprep.subr.mxu0 0.0
        %710 = vmatpush2.msra.mxu0 0.0
        %711 = vmatprep.subr.mxu0 0.0
        %712 = vmatpush2.msra.mxu0 0.0
        %713 = vmatprep.subr.mxu0 0.0
        %714 = vmatpush2.msra.mxu0 0.0
        %715 = vmatprep.mubr.f32.mxu0 0.0
        %716 = vmatmul.mubr.f32.gmra.mxu0 %v373
        %v717 = vpop.f32.mrf.mxu0
        %v718 = vadd.f32 %v648, %v717
        %v719 = vpop.f32.mrf.mxu0
        %720 = vdwg.mxu0
        %v721 = vld [vmem:[%s5] sm:$0x1]
        %v723 = vlaneseq
        %v724 = vshrl.u32 %v723, 7
        %v725 = vsub.s32 0, %v724
        %v726 = vrot.slane %v721, %v725
        %v728 = vadd.f32 %v718, %v726
        %v729 = vtanh.pop %v728
        %vm730 = vcmp.lt.s32.totalorder %v460, 2
        %v731 = vsel %vm730, 1, 0
        %vm732 = vcmp.eq.s32.totalorder %v731, 1
        %v733 = vsel %vm732, %v366, %v729
        %734 = vst.msk [vmem:[%s357] sm:$0xff] %vm371, %v733
        %735 = vst.msk [vmem:[%s364] sm:$0xff] %vm485, %v496
        %s736 = sand.u32 %s183, 1
        %s737 = scalar_lea.sflag [#allocation4], %s736
        %s738 = sand.u32 %s183, 1
        %s739 = smul.addr %s738, 8
        %s740 = scalar_lea.vmem [#allocation10], %s739
        %s741 = sand.u32 %s211, 1
        %s742 = scalar_lea.sflag [#allocation12], %s741
        %s743 = sand.u32 %s211, 1
        %s744 = smul.addr %s743, 8
        %s745 = scalar_lea.vmem [#allocation11], %s744
        // Predicated region
        $region61: #{tpu_custom_call.1} parent=43 // pred_check
          %p746 = pneg %p193
        $region62: #{tpu_custom_call.1} parent=43 // pred_check_branch
          %748 = sbr.rel (%p746) target = $region64
        $region63: #{tpu_custom_call.1} parent=43 // pred_region
          %s750 = ssub.s32 128, 128
          %751 = vsyncadd %s737, %s750
          %s752 = sadd.s32 %s35, %s34
          %s753 = smul.addr %s752, 128
          %s754 = scalar_lea.hbm %s6, %s753
          %s756 = sshll.u32 %s740, 4
          %s757 = int_to_ptr.vmem [resolvable:$true] %s756
          %759 = dma.vmem_to_hbm [thread:$0]  %s757, 128, %s754, %s737
        $region64: #{tpu_custom_call.1} parent=43 // pred_fallthru
          _
        // Predicated region
        $region65: #{tpu_custom_call.1} parent=43 // pred_check
          %p760 = pneg %p221
        $region66: #{tpu_custom_call.1} parent=43 // pred_check_branch
          %762 = sbr.rel (%p760) target = $region68
        $region67: #{tpu_custom_call.1} parent=43 // pred_region
          %s764 = ssub.s32 128, 128
          %765 = vsyncadd %s742, %s764
          %s766 = sadd.s32 %s35, %s34
          %s767 = smul.addr %s766, 128
          %s768 = scalar_lea.hbm %s7, %s767
          %s770 = sshll.u32 %s745, 4
          %s771 = int_to_ptr.vmem [resolvable:$true] %s770
          %773 = dma.vmem_to_hbm [thread:$0]  %s771, 128, %s768, %s742
        $region68: #{tpu_custom_call.1} parent=43 // pred_fallthru
          _
      $region44: #{tpu_custom_call.1} parent=5 // pred_fallthru
        _
      %p774 = scmp.le.s32.totalorder 2, %s25
      // Predicated region
      $region69: #{tpu_custom_call.1} parent=5 // pred_check
        %p775 = pneg %p774
      $region70: #{tpu_custom_call.1} parent=5 // pred_check_branch
        %777 = sbr.rel (%p775) target = $region72
      $region71: #{tpu_custom_call.1} parent=5 // pred_region
        %s778 = ssub.s32 %s25, 2
        // Predicated region
        $region73: #{tpu_custom_call.1} parent=71 // pred_check
          %p779 = pneg %p199
        $region74: #{tpu_custom_call.1} parent=71 // pred_check_branch
          %781 = sbr.rel (%p779) target = $region76
        $region75: #{tpu_custom_call.1} parent=71 // pred_region
          %s782 = sand.u32 %s184, 1
          %s783 = scalar_lea.sflag [#allocation4], %s782
          %s784 = sand.u32 %s184, 1
          %s785 = smul.addr %s784, 8
          %s786 = scalar_lea.vmem [#allocation10], %s785
          %787 = dma.done %s783, 128
        $region76: #{tpu_custom_call.1} parent=71 // pred_fallthru
          _
        // Predicated region
        $region77: #{tpu_custom_call.1} parent=71 // pred_check
          %p788 = pneg %p227
        $region78: #{tpu_custom_call.1} parent=71 // pred_check_branch
          %790 = sbr.rel (%p788) target = $region80
        $region79: #{tpu_custom_call.1} parent=71 // pred_region
          %s791 = sand.u32 %s212, 1
          %s792 = scalar_lea.sflag [#allocation12], %s791
          %s793 = sand.u32 %s212, 1
          %s794 = smul.addr %s793, 8
          %s795 = scalar_lea.vmem [#allocation11], %s794
          %796 = dma.done %s792, 128
        $region80: #{tpu_custom_call.1} parent=71 // pred_fallthru
          _
      $region72: #{tpu_custom_call.1} parent=5 // pred_fallthru
        _
    $region6: #{tpu_custom_call.1} parent=1 // loop_footer
      %s29 = sadd.s32 1, %s25
    $region7: #{tpu_custom_call.1} parent=1 // loop_footer_branch
      %24 = sbr.rel target = $region3
    $region8: #{tpu_custom_call.1} parent=1 // loop_exit
      _
    %797 = vsyncpa [#allocation3], 1
    %s798 = scalar_lea.sflag [#allocation3], 1
    %799 = vsyncpa %s798, 1
    %800 = vsyncpa [#allocation6], 1
    %801 = vsyncpa [#allocation9], 1
    %802 = vsyncpa [#allocation4], 1
    %s803 = scalar_lea.sflag [#allocation4], 1
    %804 = vsyncpa %s803, 1
    %805 = vsyncpa [#allocation12], 1
    %s806 = scalar_lea.sflag [#allocation12], 1
    %807 = vsyncpa %s806, 1

</llo_original>
